<compile_context>
chip_gen: v7x
topology: tpu7x:2x2x1
jax: 0.10.0
libtpu: 0.0.40
codegen_flags: <defaults>
</compile_context>

<pallas_src>
import math

import jax
import jax.numpy as jnp
from jax.experimental import pallas as pl
from jax.experimental.pallas import tpu as pltpu


def _build_pe_table(d_model: int, max_len: int) -> jnp.ndarray:
    """Sinusoidal table matching the PyTorch buffer: shape [max_len, 1, d_model], f32."""
    position = jnp.arange(0, max_len, dtype=jnp.float32)[:, None]           # [L, 1]
    div_term = jnp.exp(
        jnp.arange(0, d_model, 2, dtype=jnp.float32) * (-math.log(10000.0) / d_model)
    )                                                                        # [D/2]
    args = position * div_term                                               # [L, D/2]
    pe = jnp.zeros((max_len, d_model), dtype=jnp.float32)
    pe = pe.at[:, 0::2].set(jnp.sin(args))
    pe = pe.at[:, 1::2].set(jnp.cos(args))
    # matches torch: pe.unsqueeze(0).transpose(0, 1) -> [max_len, 1, d_model]
    return pe[:, None, :]


def _round_up(n: int, m: int) -> int:
    return -(-n // m) * m


def _pe_add_kernel(x_ref, pe_ref, o_ref):
    # x_ref: [TS, B, D]; pe_ref: [TS, 1, D] -> broadcast over the batch axis.
    # pe stays f32; the add promotes in-register and the store casts to the
    # activation dtype (matches PyTorch's promote-then-(implicit)-cast).
    o_ref[...] = (x_ref[...] + pe_ref[...]).astype(o_ref.dtype)


def positional_encoding_forward(
    x: jnp.ndarray,
    pe_table: jnp.ndarray,
    *,
    block_bytes: int = 16 * 1024 * 1024,
    alias_input: bool = False,
    use_core_parallel: bool = False,
) -> jnp.ndarray:
    """x: [S, B, D]; pe_table: [max_len, 1, D] (f32).  Returns x + pe[:S] (eval-mode dropout)."""
    S, B, D = x.shape
    max_len = pe_table.shape[0]
    assert S <= max_len, "seq_len exceeds positional-encoding table"

    # --- tile sizing (dtype-aware VMEM footprint per seq row of one grid step) ---
    itemsize = jnp.dtype(x.dtype).itemsize
    sublane_unit = 8 * max(1, 4 // itemsize)        # 8 (f32), 16 (bf16), 32 (int8)
    pad_b = _round_up(B, sublane_unit)              # sublane padding of the batch axis
    pad_d = _round_up(D, 128)                       # lane padding of the feature axis
    pe_itemsize = jnp.dtype(pe_table.dtype).itemsize
    pe_sublane = 8 * max(1, 4 // pe_itemsize)
    # x block + out block (+ pe block, padded to its own sublane tile) per ts row:
    row_bytes = 2 * pad_b * pad_d * itemsize + pe_sublane * pad_d * pe_itemsize

    limit_rows = max(1, block_bytes // row_bytes)
    ts = max(sublane_unit, (limit_rows // 8) * 8)   # multiple of 8, never collapse to 1
    ts = min(ts, S)
    grid = (pl.cdiv(S, ts),)                        # ragged last block masked by Pallas

    # Cover the double-buffered working set explicitly (2 x (x + out + pe) blocks
    # + headroom).  Kept comfortably under v7x's 64 MiB physical VMEM.
    vmem_limit = min(2 * ts * row_bytes + (8 << 20), 56 << 20)

    seq_sem = pltpu.CORE_PARALLEL if use_core_parallel else "parallel"

    return pl.pallas_call(
        _pe_add_kernel,
        out_shape=jax.ShapeDtypeStruct((S, B, D), x.dtype),
        grid=grid,
        in_specs=[
            pl.BlockSpec((ts, B, D), lambda i: (i, 0, 0)),
            # Index straight into the full pe table; no dynamic_slice / copy of pe.
            pl.BlockSpec((ts, 1, D), lambda i: (i, 0, 0)),
        ],
        out_specs=pl.BlockSpec((ts, B, D), lambda i: (i, 0, 0)),
        compiler_params=pltpu.CompilerParams(
            dimension_semantics=(seq_sem,),
            vmem_limit_bytes=vmem_limit,
        ),
        # Production: alias x to the output to halve activation HBM footprint
        # around the call (traffic unchanged).  Off by default for the demo.
        input_output_aliases=({0: 0} if alias_input else {}),
    )(x, pe_table)


if __name__ == "__main__":
    # Small shapes consistent with the module's forward: [seq, batch, d_model].
    # d_model % 128 == 0 keeps stores lane-dense; S deliberately NOT a multiple
    # of the tile size so the cdiv/ragged-last-block path is exercised.
    seq_len, batch, d_model = 250, 8, 128
    max_len = 512  # parameter table (module default is 5000; small here)

    key = jax.random.PRNGKey(0)
    x = jax.random.normal(key, (seq_len, batch, d_model), dtype=jnp.float32)
    pe_table = _build_pe_table(d_model, max_len)  # [max_len, 1, d_model] f32

    # Small block budget so the demo actually exercises a multi-step grid
    # (ts=16 -> 16 steps, last one ragged); default (16 MiB) is for production.
    out = positional_encoding_forward(x, pe_table, block_bytes=256 * 1024)
    out = jax.block_until_ready(out)

    # Sanity check against plain-JAX reference (eval-mode: dropout = identity).
    ref = x + pe_table[:seq_len]
    assert out.shape == (seq_len, batch, d_model)
    assert jnp.allclose(out, ref, atol=1e-6), "f32 mismatch vs reference"

    # Aliased (in-place-style) path: same numerics.
    out_alias = jax.block_until_ready(
        positional_encoding_forward(x, pe_table, block_bytes=256 * 1024, alias_input=True)
    )
    assert jnp.allclose(out_alias, ref, atol=1e-6), "aliased-output mismatch vs reference"

    # bf16 path: pe stays f32, add promotes to f32, store casts to bf16.
    x_bf16 = x.astype(jnp.bfloat16)
    out_bf16 = jax.block_until_ready(
        positional_encoding_forward(x_bf16, pe_table, block_bytes=256 * 1024)
    )
    ref_bf16 = (x_bf16.astype(jnp.float32) + pe_table[:seq_len]).astype(jnp.bfloat16)
    assert out_bf16.dtype == jnp.bfloat16
    assert jnp.allclose(
        out_bf16.astype(jnp.float32), ref_bf16.astype(jnp.float32), atol=1e-2
    ), "bf16 mismatch vs reference"

    print("KERNEL_OK")
</pallas_src>

<mosaic_0001>
module attributes {stable_mosaic.version = 11 : i64} {
  func.func @_pe_add_kernel(%arg0: i32, %arg1: memref<16x8x128xf32, #tpu.memory_space<vmem>>, %arg2: memref<16x1x128xf32, #tpu.memory_space<vmem>>, %arg3: memref<16x8x128xf32, #tpu.memory_space<vmem>>) attributes {dimension_semantics = [#tpu.dimension_semantics<parallel>], iteration_bounds = array<i64: 16>, scalar_prefetch = 0 : i64, scratch_operands = 0 : i64, tpu.core_type = #tpu.core_type<tc>, window_params = [{transform_indices = @transform_0, window_bounds = array<i64: 16, 8, 128>}, {transform_indices = @transform_1, window_bounds = array<i64: 16, 1, 128>}, {transform_indices = @transform_2, window_bounds = array<i64: 16, 8, 128>}]} {
    %c0 = arith.constant 0 : index
    %c0_0 = arith.constant 0 : index
    %c0_1 = arith.constant 0 : index
    %0 = vector.load %arg1[%c0, %c0_0, %c0_1] : memref<16x8x128xf32, #tpu.memory_space<vmem>>, vector<16x8x128xf32>
    %c0_2 = arith.constant 0 : index
    %c0_3 = arith.constant 0 : index
    %c0_4 = arith.constant 0 : index
    %1 = vector.load %arg2[%c0_2, %c0_3, %c0_4] : memref<16x1x128xf32, #tpu.memory_space<vmem>>, vector<16x1x128xf32>
    %2 = vector.broadcast %1 : vector<16x1x128xf32> to vector<16x8x128xf32>
    %3 = arith.addf %0, %2 : vector<16x8x128xf32>
    %c0_5 = arith.constant 0 : index
    %c0_6 = arith.constant 0 : index
    %c0_7 = arith.constant 0 : index
    %4 = vector.load %arg3[%c0_5, %c0_6, %c0_7] : memref<16x8x128xf32, #tpu.memory_space<vmem>>, vector<16x8x128xf32>
    tpu.vector_store %arg3[%c0_5, %c0_6, %c0_7], %3 {strides = array<i32>} : memref<16x8x128xf32, #tpu.memory_space<vmem>>, vector<16x8x128xf32>,
    return
  }
  func.func @transform_0(%arg0: i32) -> (i32, i32, i32) {
    %c0_i32 = arith.constant 0 : i32
    %c0_i32_0 = arith.constant 0 : i32
    %c0_i32_1 = arith.constant 0 : i32
    return %arg0, %c0_i32, %c0_i32_0 : i32, i32, i32
  }
  func.func @transform_1(%arg0: i32) -> (i32, i32, i32) {
    %c0_i32 = arith.constant 0 : i32
    %c0_i32_0 = arith.constant 0 : i32
    %c0_i32_1 = arith.constant 0 : i32
    return %arg0, %c0_i32, %c0_i32_0 : i32, i32, i32
  }
  func.func @transform_2(%arg0: i32) -> (i32, i32, i32) {
    %c0_i32 = arith.constant 0 : i32
    %c0_i32_0 = arith.constant 0 : i32
    %c0_i32_1 = arith.constant 0 : i32
    return %arg0, %c0_i32, %c0_i32_0 : i32, i32, i32
  }
}

</mosaic_0001>

<llo_original>
// kernel: tpu_custom_call.1
$region0: #{tpu_custom_call.1}
  #allocation0 [shape = 'u32[]', space=smem, size = 0x4, offset = 0x4, fixed_abs, tag = 'smem constant byte address 0x4 - core index']
  #allocation1 [shape = 'u32[144,128]{1,0:T(1,128)}', space=vmem, size = 0x12000, scoped, tag = 'internal scratch']
  %s0 = inlined_call_operand.hbm [shape: f32[250,8,128], index: 0, kind: input, shape index: {}]
  %s1 = inlined_call_operand.hbm [shape: f32[512,1,128], index: 1, kind: input, shape index: {}]
  %s2 = inlined_call_operand.hbm [shape: f32[250,8,128], index: 2, kind: output, shape index: {}]
  %s3 = sld [smem:[#allocation0]]
  $region49: #{tpu_custom_call.1} parent=0
    _
  %s5 = ssub.s32 1, %s3
  %s6 = scalar_select 0, %s5, %s3
  $region1: #{tpu_custom_call.1} parent=0
    #allocation2 [shape = 'u8[131072]{0}', space=vmem, size = 0x20000, scoped, tag = 'input window, operand 0']
    #allocation3 [shape = 's32[2]{0}', space=sflag, size = 0x8, scoped, tag = 'scoped memory for tpu_custom_call.1']
    #allocation4 [shape = 's32[2]{0}', space=sflag, size = 0x8, scoped, tag = 'scoped memory for tpu_custom_call.1']
    #allocation5 [shape = 'u8[16384]{0}', space=vmem, size = 0x4000, scoped, tag = 'input window, operand 1']
    #allocation6 [shape = 's32[2]{0}', space=sflag, size = 0x8, scoped, tag = 'scoped memory for tpu_custom_call.1']
    #allocation7 [shape = 'u8[131072]{0}', space=vmem, size = 0x20000, scoped, tag = 'output window, operand 0']
    %7 = vsyncpa [#allocation3], 0
    %s8 = scalar_lea.sflag [#allocation3], 1
    %9 = vsyncpa %s8, 0
    %10 = vsyncpa [#allocation6], 0
    %s11 = scalar_lea.sflag [#allocation6], 1
    %12 = vsyncpa %s11, 0
    %13 = vsyncpa [#allocation4], 0
    %s14 = scalar_lea.sflag [#allocation4], 1
    %15 = vsyncpa %s14, 0
    loop: start=0, step=1, limit=18
    $region2: #{tpu_custom_call.1} parent=1 // loop_pre_header
      _
    $region3: #{tpu_custom_call.1} parent=1 // loop_header
      %s17 = sphi 0, %s21
      %p18 = scmp.ge.s32.totalorder %s17, 18
      %s27 = sphi 0, %s29
      %s30 = sphi 0, %s27
      %s31 = sphi 0, %s30
      %s47 = sphi 0, %s31
      %s53 = sphi 0, %s55
      %s56 = sphi 0, %s53
      %s57 = sphi 0, %s56
      %s73 = sphi 0, %s57
      %s79 = sphi 0, %s81
      %s82 = sphi 0, %s79
      %s83 = sphi 0, %s82
      %s99 = sphi 0, %s83
    $region4: #{tpu_custom_call.1} parent=1 // loop_header_branch
      %20 = sbr.rel (%p18) target = $region8
    $region5: #{tpu_custom_call.1} parent=1 // loop_body
      %s22 = ssub.s32 %s17, 1
      %s23 = ssub.s32 %s17, 2
      %s24 = sadd.s32 %s17, 1
      %s25 = ssub.s32 %s17, %s24
      %p26 = scmp.eq.s32.totalorder %s25, 0
      %s28 = sadd.s32 %s27, 1
      %s29 = scalar_select %p26, %s27, %s28
      %p32 = pneg %p26
      %p33 = scmp.eq.s32.totalorder %s17, 15
      %p34 = por %p32, %p33
      %p35 = scmp.ne.s32.totalorder %s27, %s30
      %p36 = scmp.eq.s32.totalorder %s17, 0
      %p37 = por %p35, %p36
      %p38 = scmp.ne.s32.totalorder %s27, %s30
      %p39 = scmp.eq.s32.totalorder %s22, 15
      %p40 = por %p38, %p39
      %p41 = scmp.ne.s32.totalorder %s30, %s31
      %p42 = scmp.eq.s32.totalorder %s22, 0
      %p43 = por %p41, %p42
      %p44 = scmp.ne.s32.totalorder %s30, %s31
      %p45 = scmp.eq.s32.totalorder %s23, 15
      %p46 = por %p44, %p45
      %p48 = scmp.ne.s32.totalorder %s31, %s47
      %p49 = scmp.eq.s32.totalorder %s23, 0
      %p50 = por %p48, %p49
      %s51 = ssub.s32 %s17, %s24
      %p52 = scmp.eq.s32.totalorder %s51, 0
      %s54 = sadd.s32 %s53, 1
      %s55 = scalar_select %p52, %s53, %s54
      %p58 = pneg %p52
      %p59 = scmp.eq.s32.totalorder %s17, 15
      %p60 = por %p58, %p59
      %p61 = scmp.ne.s32.totalorder %s53, %s56
      %p62 = scmp.eq.s32.totalorder %s17, 0
      %p63 = por %p61, %p62
      %p64 = scmp.ne.s32.totalorder %s53, %s56
      %p65 = scmp.eq.s32.totalorder %s22, 15
      %p66 = por %p64, %p65
      %p67 = scmp.ne.s32.totalorder %s56, %s57
      %p68 = scmp.eq.s32.totalorder %s22, 0
      %p69 = por %p67, %p68
      %p70 = scmp.ne.s32.totalorder %s56, %s57
      %p71 = scmp.eq.s32.totalorder %s23, 15
      %p72 = por %p70, %p71
      %p74 = scmp.ne.s32.totalorder %s57, %s73
      %p75 = scmp.eq.s32.totalorder %s23, 0
      %p76 = por %p74, %p75
      %s77 = ssub.s32 %s17, %s24
      %p78 = scmp.eq.s32.totalorder %s77, 0
      %s80 = sadd.s32 %s79, 1
      %s81 = scalar_select %p78, %s79, %s80
      %p84 = pneg %p78
      %p85 = scmp.eq.s32.totalorder %s17, 15
      %p86 = por %p84, %p85
      %p87 = scmp.ne.s32.totalorder %s79, %s82
      %p88 = scmp.eq.s32.totalorder %s17, 0
      %p89 = por %p87, %p88
      %p90 = scmp.ne.s32.totalorder %s79, %s82
      %p91 = scmp.eq.s32.totalorder %s22, 15
      %p92 = por %p90, %p91
      %p93 = scmp.ne.s32.totalorder %s82, %s83
      %p94 = scmp.eq.s32.totalorder %s22, 0
      %p95 = por %p93, %p94
      %p96 = scmp.ne.s32.totalorder %s82, %s83
      %p97 = scmp.eq.s32.totalorder %s23, 15
      %p98 = por %p96, %p97
      %p100 = scmp.ne.s32.totalorder %s83, %s99
      %p101 = scmp.eq.s32.totalorder %s23, 0
      %p102 = por %p100, %p101
      %p103 = scmp.le.s32.totalorder 1, %s17
      %p104 = scmp.lt.s32.totalorder %s17, 17
      %p105 = pnand %p103, %p104
      %p106 = pneg %p105
      // Predicated region
      $region9: #{tpu_custom_call.1} parent=5 // pred_check
        _
      $region10: #{tpu_custom_call.1} parent=5 // pred_check_branch
        %108 = sbr.rel (%p105) target = $region12
      $region11: #{tpu_custom_call.1} parent=5 // pred_region
        %s109 = ssub.s32 %s17, 1
      $region12: #{tpu_custom_call.1} parent=5 // pred_fallthru
        _
      %p110 = scmp.lt.s32.totalorder %s17, 16
      // Predicated region
      $region13: #{tpu_custom_call.1} parent=5 // pred_check
        %p111 = pneg %p110
      $region14: #{tpu_custom_call.1} parent=5 // pred_check_branch
        %113 = sbr.rel (%p111) target = $region16
      $region15: #{tpu_custom_call.1} parent=5 // pred_region
        // Predicated region
        $region17: #{tpu_custom_call.1} parent=15 // pred_check
          %p114 = pneg %p37
        $region18: #{tpu_custom_call.1} parent=15 // pred_check_branch
          %116 = sbr.rel (%p114) target = $region20
        $region19: #{tpu_custom_call.1} parent=15 // pred_region
          %s117 = sand.u32 %s27, 1
          %s118 = scalar_lea.sflag [#allocation3], %s117
          %s119 = sand.u32 %s27, 1
          %s120 = smul.addr %s119, 128
          %s121 = scalar_lea.vmem [#allocation2], %s120
          %s122 = smul.u32 16, %s17
          %s123 = ssub.s32 250, %s122
          %p124 = scmp.lt.s32.totalorder %s123, 16
          %s125 = scalar_select %p124, %s123, 16
          %s126 = smul.u32 128, %s125
          %s128 = ssub.s32 2048, %s126
          %129 = vsyncadd %s118, %s128
          %p130 = scmp.ne.s32.totalorder 0, %s126
          %s131 = smul.addr %s122, 128
          %s132 = scalar_lea.hbm %s0, %s131
          %s133 = smul.u32 8, %s125
          %s134 = sshll.u32 %s121, 4
          %s135 = int_to_ptr.vmem [resolvable:$true] %s134
          %s136 = sshll.u32 %s133, 4
          %140 = dma.hbm_to_vmem [thread:$0]  (%p130), %s132, %s136, %s135, %s118, 128, 128, 8
        $region20: #{tpu_custom_call.1} parent=15 // pred_fallthru
          _
        // Predicated region
        $region21: #{tpu_custom_call.1} parent=15 // pred_check
          %p141 = pneg %p63
        $region22: #{tpu_custom_call.1} parent=15 // pred_check_branch
          %143 = sbr.rel (%p141) target = $region24
        $region23: #{tpu_custom_call.1} parent=15 // pred_region
          %s144 = sand.u32 %s53, 1
          %s145 = scalar_lea.sflag [#allocation6], %s144
          %s146 = sand.u32 %s53, 1
          %s147 = smul.addr %s146, 16
          %s148 = scalar_lea.vmem [#allocation5], %s147
          %s149 = smul.u32 16, %s17
          %s151 = ssub.s32 256, 256
          %152 = vsyncadd %s145, %s151
          %s153 = smul.addr %s149, 16
          %s154 = scalar_lea.hbm %s1, %s153
          %s155 = sshll.u32 %s148, 4
          %s156 = int_to_ptr.vmem [resolvable:$true] %s155
          %161 = dma.hbm_to_vmem [thread:$0]  %s154, 256, %s156, %s145, 16, 16, 1
        $region24: #{tpu_custom_call.1} parent=15 // pred_fallthru
          _
      $region16: #{tpu_custom_call.1} parent=5 // pred_fallthru
        _
      %p162 = scmp.le.s32.totalorder 1, %s17
      %p163 = scmp.lt.s32.totalorder %s17, 17
      %p164 = pnand %p162, %p163
      %p165 = pneg %p164
      // Predicated region
      $region25: #{tpu_custom_call.1} parent=5 // pred_check
        _
      $region26: #{tpu_custom_call.1} parent=5 // pred_check_branch
        %167 = sbr.rel (%p164) target = $region28
      $region27: #{tpu_custom_call.1} parent=5 // pred_region
        %s168 = ssub.s32 %s17, 1
        %s169 = sand.u32 %s30, 1
        %s170 = scalar_lea.sflag [#allocation3], %s169
        %s171 = sand.u32 %s30, 1
        %s172 = smul.addr %s171, 128
        %s173 = scalar_lea.vmem [#allocation2], %s172
        // Predicated region
        $region29: #{tpu_custom_call.1} parent=27 // pred_check
          %p174 = pneg %p43
        $region30: #{tpu_custom_call.1} parent=27 // pred_check_branch
          %176 = sbr.rel (%p174) target = $region32
        $region31: #{tpu_custom_call.1} parent=27 // pred_region
          %177 = dma.done %s170, 2048
        $region32: #{tpu_custom_call.1} parent=27 // pred_fallthru
          _
        %s178 = sand.u32 %s56, 1
        %s179 = scalar_lea.sflag [#allocation6], %s178
        %s180 = sand.u32 %s56, 1
        %s181 = smul.addr %s180, 16
        %s182 = scalar_lea.vmem [#allocation5], %s181
        // Predicated region
        $region33: #{tpu_custom_call.1} parent=27 // pred_check
          %p183 = pneg %p69
        $region34: #{tpu_custom_call.1} parent=27 // pred_check_branch
          %185 = sbr.rel (%p183) target = $region36
        $region35: #{tpu_custom_call.1} parent=27 // pred_region
          %186 = dma.done %s179, 256
        $region36: #{tpu_custom_call.1} parent=27 // pred_fallthru
          _
        %s187 = sand.u32 %s30, 1
        %s188 = scalar_lea.sflag [#allocation3], %s187
        %s189 = sand.u32 %s30, 1
        %s190 = smul.addr %s189, 128
        %s191 = scalar_lea.vmem [#allocation2], %s190
        %p192 = pneg %p43
        %p193 = pneg %p40
        %s194 = sand.u32 %s56, 1
        %s195 = scalar_lea.sflag [#allocation6], %s194
        %s196 = sand.u32 %s56, 1
        %s197 = smul.addr %s196, 16
        %s198 = scalar_lea.vmem [#allocation5], %s197
        %p199 = pneg %p69
        %p200 = pneg %p66
        %p201 = pneg %p95
        %p202 = pneg %p92
        %s203 = sand.u32 %s82, 1
        %s204 = scalar_lea.sflag [#allocation4], %s203
        %s205 = sand.u32 %s82, 1
        %s206 = smul.addr %s205, 128
        %s207 = scalar_lea.vmem [#allocation7], %s206
        %s208 = smul.u32 16, %s22
        %s209 = ssub.s32 250, %s208
        %p210 = scmp.lt.s32.totalorder %s209, 16
        %s211 = scalar_select %p210, %s209, 16
        %s212 = smul.u32 128, %s211
        %s213 = smul.u32 16, %s22
        %s214 = smul.u32 16, %s22
        %s215 = ssub.s32 250, %s214
        %p216 = scmp.lt.s32.totalorder %s215, 16
        %s217 = scalar_select %p216, %s215, 16
        %s218 = smul.u32 128, %s217
        %v219 = vld [vmem:[%s173] sm:$0xff]
        %v220 = vld [vmem:[%s173 + $0x8] sm:$0xff]
        %v221 = vld [vmem:[%s173 + $0x10] sm:$0xff]
        %v222 = vld [vmem:[%s173 + $0x18] sm:$0xff]
        %v223 = vld [vmem:[%s173 + $0x20] sm:$0xff]
        %v224 = vld [vmem:[%s173 + $0x28] sm:$0xff]
        %v225 = vld [vmem:[%s173 + $0x30] sm:$0xff]
        %v226 = vld [vmem:[%s173 + $0x38] sm:$0xff]
        %v227 = vld [vmem:[%s173 + $0x40] sm:$0xff]
        %v228 = vld [vmem:[%s173 + $0x48] sm:$0xff]
        %v229 = vld [vmem:[%s173 + $0x50] sm:$0xff]
        %v230 = vld [vmem:[%s173 + $0x58] sm:$0xff]
        %v231 = vld [vmem:[%s173 + $0x60] sm:$0xff]
        %v232 = vld [vmem:[%s173 + $0x68] sm:$0xff]
        %v233 = vld [vmem:[%s173 + $0x70] sm:$0xff]
        %v234 = vld [vmem:[%s173 + $0x78] sm:$0xff]
        %v235 = vld [vmem:[%s182] sm:$0x1]
        %v236 = vld [vmem:[%s182 + $0x1] sm:$0x1]
        %v237 = vld [vmem:[%s182 + $0x2] sm:$0x1]
        %v238 = vld [vmem:[%s182 + $0x3] sm:$0x1]
        %v239 = vld [vmem:[%s182 + $0x4] sm:$0x1]
        %v240 = vld [vmem:[%s182 + $0x5] sm:$0x1]
        %v241 = vld [vmem:[%s182 + $0x6] sm:$0x1]
        %v242 = vld [vmem:[%s182 + $0x7] sm:$0x1]
        %v243 = vld [vmem:[%s182 + $0x8] sm:$0x1]
        %v244 = vld [vmem:[%s182 + $0x9] sm:$0x1]
        %v245 = vld [vmem:[%s182 + $0xa] sm:$0x1]
        %v246 = vld [vmem:[%s182 + $0xb] sm:$0x1]
        %v247 = vld [vmem:[%s182 + $0xc] sm:$0x1]
        %v248 = vld [vmem:[%s182 + $0xd] sm:$0x1]
        %v249 = vld [vmem:[%s182 + $0xe] sm:$0x1]
        %v250 = vld [vmem:[%s182 + $0xf] sm:$0x1]
        %v267 = vlaneseq
        %v268 = vshrl.u32 %v267, 7
        %v269 = vsub.s32 0, %v268
        %v270 = vrot.slane %v235, %v269
        %v271 = vlaneseq
        %v272 = vshrl.u32 %v271, 7
        %v273 = vsub.s32 0, %v272
        %v274 = vrot.slane %v236, %v273
        %v275 = vlaneseq
        %v276 = vshrl.u32 %v275, 7
        %v277 = vsub.s32 0, %v276
        %v278 = vrot.slane %v237, %v277
        %v279 = vlaneseq
        %v280 = vshrl.u32 %v279, 7
        %v281 = vsub.s32 0, %v280
        %v282 = vrot.slane %v238, %v281
        %v283 = vlaneseq
        %v284 = vshrl.u32 %v283, 7
        %v285 = vsub.s32 0, %v284
        %v286 = vrot.slane %v239, %v285
        %v287 = vlaneseq
        %v288 = vshrl.u32 %v287, 7
        %v289 = vsub.s32 0, %v288
        %v290 = vrot.slane %v240, %v289
        %v291 = vlaneseq
        %v292 = vshrl.u32 %v291, 7
        %v293 = vsub.s32 0, %v292
        %v294 = vrot.slane %v241, %v293
        %v295 = vlaneseq
        %v296 = vshrl.u32 %v295, 7
        %v297 = vsub.s32 0, %v296
        %v298 = vrot.slane %v242, %v297
        %v299 = vlaneseq
        %v300 = vshrl.u32 %v299, 7
        %v301 = vsub.s32 0, %v300
        %v302 = vrot.slane %v243, %v301
        %v303 = vlaneseq
        %v304 = vshrl.u32 %v303, 7
        %v305 = vsub.s32 0, %v304
        %v306 = vrot.slane %v244, %v305
        %v307 = vlaneseq
        %v308 = vshrl.u32 %v307, 7
        %v309 = vsub.s32 0, %v308
        %v310 = vrot.slane %v245, %v309
        %v311 = vlaneseq
        %v312 = vshrl.u32 %v311, 7
        %v313 = vsub.s32 0, %v312
        %v314 = vrot.slane %v246, %v313
        %v315 = vlaneseq
        %v316 = vshrl.u32 %v315, 7
        %v317 = vsub.s32 0, %v316
        %v318 = vrot.slane %v247, %v317
        %v319 = vlaneseq
        %v320 = vshrl.u32 %v319, 7
        %v321 = vsub.s32 0, %v320
        %v322 = vrot.slane %v248, %v321
        %v323 = vlaneseq
        %v324 = vshrl.u32 %v323, 7
        %v325 = vsub.s32 0, %v324
        %v326 = vrot.slane %v249, %v325
        %v327 = vlaneseq
        %v328 = vshrl.u32 %v327, 7
        %v329 = vsub.s32 0, %v328
        %v330 = vrot.slane %v250, %v329
        %v347 = vadd.f32 %v219, %v270
        %v348 = vadd.f32 %v220, %v274
        %v349 = vadd.f32 %v221, %v278
        %v350 = vadd.f32 %v222, %v282
        %v351 = vadd.f32 %v223, %v286
        %v352 = vadd.f32 %v224, %v290
        %v353 = vadd.f32 %v225, %v294
        %v354 = vadd.f32 %v226, %v298
        %v355 = vadd.f32 %v227, %v302
        %v356 = vadd.f32 %v228, %v306
        %v357 = vadd.f32 %v229, %v310
        %v358 = vadd.f32 %v230, %v314
        %v359 = vadd.f32 %v231, %v318
        %v360 = vadd.f32 %v232, %v322
        %v361 = vadd.f32 %v233, %v326
        %v362 = vadd.f32 %v234, %v330
        %363 = vst [vmem:[%s207] sm:$0xff] %v347
        %364 = vst [vmem:[%s207 + $0x8] sm:$0xff] %v348
        %365 = vst [vmem:[%s207 + $0x10] sm:$0xff] %v349
        %366 = vst [vmem:[%s207 + $0x18] sm:$0xff] %v350
        %367 = vst [vmem:[%s207 + $0x20] sm:$0xff] %v351
        %368 = vst [vmem:[%s207 + $0x28] sm:$0xff] %v352
        %369 = vst [vmem:[%s207 + $0x30] sm:$0xff] %v353
        %370 = vst [vmem:[%s207 + $0x38] sm:$0xff] %v354
        %371 = vst [vmem:[%s207 + $0x40] sm:$0xff] %v355
        %372 = vst [vmem:[%s207 + $0x48] sm:$0xff] %v356
        %373 = vst [vmem:[%s207 + $0x50] sm:$0xff] %v357
        %374 = vst [vmem:[%s207 + $0x58] sm:$0xff] %v358
        %375 = vst [vmem:[%s207 + $0x60] sm:$0xff] %v359
        %376 = vst [vmem:[%s207 + $0x68] sm:$0xff] %v360
        %377 = vst [vmem:[%s207 + $0x70] sm:$0xff] %v361
        %378 = vst [vmem:[%s207 + $0x78] sm:$0xff] %v362
        %s379 = sand.u32 %s82, 1
        %s380 = scalar_lea.sflag [#allocation4], %s379
        %s381 = sand.u32 %s82, 1
        %s382 = smul.addr %s381, 128
        %s383 = scalar_lea.vmem [#allocation7], %s382
        // Predicated region
        $region37: #{tpu_custom_call.1} parent=27 // pred_check
          %p384 = pneg %p92
        $region38: #{tpu_custom_call.1} parent=27 // pred_check_branch
          %386 = sbr.rel (%p384) target = $region40
        $region39: #{tpu_custom_call.1} parent=27 // pred_region
          %s387 = smul.u32 16, %s22
          %s388 = ssub.s32 250, %s387
          %p389 = scmp.lt.s32.totalorder %s388, 16
          %s390 = scalar_select %p389, %s388, 16
          %s391 = smul.u32 128, %s390
          %s393 = ssub.s32 2048, %s391
          %394 = vsyncadd %s380, %s393
          %p395 = scmp.ne.s32.totalorder 0, %s391
          %s396 = smul.addr %s387, 128
          %s397 = scalar_lea.hbm %s2, %s396
          %s398 = smul.u32 8, %s390
          %s399 = sshll.u32 %s383, 4
          %s400 = int_to_ptr.vmem [resolvable:$true] %s399
          %s401 = sshll.u32 %s398, 4
          %405 = dma.vmem_to_hbm [thread:$0]  (%p395), %s400, %s401, %s397, %s380, 128, 128, 8
        $region40: #{tpu_custom_call.1} parent=27 // pred_fallthru
          _
      $region28: #{tpu_custom_call.1} parent=5 // pred_fallthru
        _
      %p406 = scmp.le.s32.totalorder 2, %s17
      // Predicated region
      $region41: #{tpu_custom_call.1} parent=5 // pred_check
        %p407 = pneg %p406
      $region42: #{tpu_custom_call.1} parent=5 // pred_check_branch
        %409 = sbr.rel (%p407) target = $region44
      $region43: #{tpu_custom_call.1} parent=5 // pred_region
        %s410 = ssub.s32 %s17, 2
        // Predicated region
        $region45: #{tpu_custom_call.1} parent=43 // pred_check
          %p411 = pneg %p98
        $region46: #{tpu_custom_call.1} parent=43 // pred_check_branch
          %413 = sbr.rel (%p411) target = $region48
        $region47: #{tpu_custom_call.1} parent=43 // pred_region
          %s414 = sand.u32 %s83, 1
          %s415 = scalar_lea.sflag [#allocation4], %s414
          %s416 = sand.u32 %s83, 1
          %s417 = smul.addr %s416, 128
          %s418 = scalar_lea.vmem [#allocation7], %s417
          %419 = dma.done %s415, 2048
        $region48: #{tpu_custom_call.1} parent=43 // pred_fallthru
          _
      $region44: #{tpu_custom_call.1} parent=5 // pred_fallthru
        _
    $region6: #{tpu_custom_call.1} parent=1 // loop_footer
      %s21 = sadd.s32 1, %s17
    $region7: #{tpu_custom_call.1} parent=1 // loop_footer_branch
      %16 = sbr.rel target = $region3
    $region8: #{tpu_custom_call.1} parent=1 // loop_exit
      _
    %420 = vsyncpa [#allocation3], 1
    %s421 = scalar_lea.sflag [#allocation3], 1
    %422 = vsyncpa %s421, 1
    %423 = vsyncpa [#allocation6], 1
    %s424 = scalar_lea.sflag [#allocation6], 1
    %425 = vsyncpa %s424, 1
    %426 = vsyncpa [#allocation4], 1
    %s427 = scalar_lea.sflag [#allocation4], 1
    %428 = vsyncpa %s427, 1

</llo_original>
